<compile_context>
chip_gen: v6e
topology: v6e:2x2x1
jax: 0.10.0
libtpu: 0.0.40
codegen_flags: <defaults>
</compile_context>

<pallas_src>
import math
import numpy as np
import jax
import jax.numpy as jnp
from jax import lax
from jax.experimental import pallas as pl
from jax.experimental.pallas import tpu as pltpu


# ------------------------- row-tiled matmul (in_proj) -------------------------

def _matmul_kernel(x_ref, w_ref, o_ref):
    o_ref[...] = jnp.dot(x_ref[...], w_ref[...],
                         preferred_element_type=jnp.float32)


def matmul(x, w, block_m=256):
    M, Kd = x.shape
    N = w.shape[1]
    bm = min(block_m, M)
    return pl.pallas_call(
        _matmul_kernel,
        out_shape=jax.ShapeDtypeStruct((M, N), jnp.float32),
        grid=(pl.cdiv(M, bm),),
        in_specs=[pl.BlockSpec((bm, Kd), lambda i: (i, 0)),
                  pl.BlockSpec((Kd, N), lambda i: (0, 0))],
        out_specs=pl.BlockSpec((bm, N), lambda i: (i, 0)),
        compiler_params=pltpu.CompilerParams(
            dimension_semantics=("parallel",)),
    )(x.astype(jnp.float32), w.astype(jnp.float32))


# ------------------ depthwise 3x3 conv + SiLU (NHWC, C on lanes) --------------

def _dwconv_silu_kernel(x_ref, w_ref, b_ref, o_ref):
    # x_ref: (1, H+2, W+2, C), w_ref: (9, C), b_ref: (1, C), o_ref: (1, H, W, C)
    H, W, C = o_ref.shape[1], o_ref.shape[2], o_ref.shape[3]
    acc = jnp.zeros((H, W, C), jnp.float32)
    for t in range(9):
        di, dj = t // 3, t % 3
        acc = acc + x_ref[0, di:di + H, dj:dj + W, :] * w_ref[t]
    acc = acc + b_ref[...]
    o_ref[0] = acc * jax.nn.sigmoid(acc)                    # SiLU


def dwconv_silu(x_nhwc, conv_w, conv_b):
    B, H, W, C = x_nhwc.shape
    xp = jnp.pad(x_nhwc, ((0, 0), (1, 1), (1, 1), (0, 0)))
    # torch depthwise weight (C, 1, 3, 3) -> tap-major (9, C)
    w9 = conv_w[:, 0].reshape(C, 9).T
    b1 = conv_b.reshape(1, C)
    return pl.pallas_call(
        _dwconv_silu_kernel,
        out_shape=jax.ShapeDtypeStruct((B, H, W, C), jnp.float32),
        grid=(B,),
        in_specs=[
            pl.BlockSpec((1, H + 2, W + 2, C), lambda b: (b, 0, 0, 0)),
            pl.BlockSpec((9, C), lambda b: (0, 0)),
            pl.BlockSpec((1, C), lambda b: (0, 0)),
        ],
        out_specs=pl.BlockSpec((1, H, W, C), lambda b: (b, 0, 0, 0)),
        compiler_params=pltpu.CompilerParams(
            dimension_semantics=("parallel",)),
    )(xp.astype(jnp.float32), w9.astype(jnp.float32), b1.astype(jnp.float32))


# ---------------- selective scan + fused projections + fused decode -----------

def _ssm_kernel(perm_ref,                            # SMEM (K, L) int32
                xs_ref, wd_ref, wb_ref, wc_ref,      # (1,L,D),(1,D,D),(1,D,N)x2
                bias_ref, A_ref, Dsk_ref,            # (1,1,D),(1,N,D),(1,1,D)
                o_ref,                               # (1, L, D)
                delta_s, b_s, c_s,                   # (L,D),(L,N),(L,N)
                da_s, dbu_s, y_s, acc_s):            # (Lc,N,D)x2,(Lc,D),(L,D)
    kdir = pl.program_id(1)
    L, D = xs_ref.shape[1], xs_ref.shape[2]
    N = A_ref.shape[1]
    Lc = da_s.shape[0]
    n_chunks = L // Lc
    ur = min(8, Lc)

    @pl.when(kdir == 0)
    def _():
        acc_s[...] = jnp.zeros_like(acc_s)

    # fused x_proj / dt_proj: lane-dense whole-L matmuls on the MXU.
    u = xs_ref[0]                                               # (L, D)
    delta_s[...] = jax.nn.softplus(
        jnp.dot(u, wd_ref[0], preferred_element_type=jnp.float32)
        + bias_ref[0])
    b_s[...] = jnp.dot(u, wb_ref[0], preferred_element_type=jnp.float32)
    c_s[...] = jnp.dot(u, wc_ref[0], preferred_element_type=jnp.float32)

    def chunk_body(c, h):
        off = pl.multiple_of(c * Lc, Lc)
        dlt = delta_s[pl.ds(off, Lc), :]                        # (Lc, D)
        uc = xs_ref[0, pl.ds(off, Lc), :]                       # (Lc, D)
        bc = b_s[pl.ds(off, Lc), :]                             # (Lc, N)
        cc = c_s[pl.ds(off, Lc), :]                             # (Lc, N)

        # discretized A and B*u for this chunk only (bounded VMEM).
        da_s[...] = jnp.exp(dlt[:, None, :] * A_ref[...])       # (Lc, N, D)
        dbu_s[...] = (dlt * uc)[:, None, :] * bc[:, :, None]    # (Lc, N, D)

        # sequential recurrence; h is a lane-dense (N, D) register carry.
        def step(i, h):
            h = da_s[i] * h + dbu_s[i]
            dbu_s[i] = h                                        # reuse as history
            return h
        h = lax.fori_loop(0, Lc, step, h, unroll=ur)

        # y_t = sum_n C_t[n] * h_t[n, :]  (+ D skip), bulk over the chunk.
        y_s[...] = (jnp.sum(dbu_s[...] * cc[:, :, None], axis=1)
                    + uc * Dsk_ref[0])

        # fused "decode": scatter-accumulate sequence rows back to their
        # spatial positions, shared accumulator across the K directions.
        def scatter(i, carry):
            p = perm_ref[kdir, off + i]
            acc_s[pl.ds(p, 1), :] = (acc_s[pl.ds(p, 1), :]
                                     + y_s[pl.ds(i, 1), :])
            return carry
        lax.fori_loop(0, Lc, scatter, 0, unroll=min(4, Lc))
        return h

    h0 = jnp.zeros((N, D), jnp.float32)
    lax.fori_loop(0, n_chunks, chunk_body, h0)

    @pl.when(kdir == pl.num_programs(1) - 1)
    def _():
        o_ref[0] = acc_s[...]                                   # one lane-dense store


def _chunk_len(L, max_chunk=128):
    c = min(L, max_chunk)
    while L % c:
        c -= 1
    return c


def ssm_scan(perm, xs, wdelta, wb, wc, bias, A_nd, Dsk, *, B, K):
    _, L, D = xs.shape
    N = A_nd.shape[1]
    Lc = _chunk_len(L)
    return pl.pallas_call(
        _ssm_kernel,
        out_shape=jax.ShapeDtypeStruct((B, L, D), jnp.float32),
        grid_spec=pltpu.PrefetchScalarGridSpec(
            num_scalar_prefetch=1,
            grid=(B, K),
            in_specs=[
                pl.BlockSpec((1, L, D), lambda b, k, p_: (b * K + k, 0, 0)),
                pl.BlockSpec((1, D, D), lambda b, k, p_: (k, 0, 0)),
                pl.BlockSpec((1, D, N), lambda b, k, p_: (k, 0, 0)),
                pl.BlockSpec((1, D, N), lambda b, k, p_: (k, 0, 0)),
                pl.BlockSpec((1, 1, D), lambda b, k, p_: (k, 0, 0)),
                pl.BlockSpec((1, N, D), lambda b, k, p_: (k, 0, 0)),
                pl.BlockSpec((1, 1, D), lambda b, k, p_: (k, 0, 0)),
            ],
            out_specs=pl.BlockSpec((1, L, D), lambda b, k, p_: (b, 0, 0)),
            scratch_shapes=[
                pltpu.VMEM((L, D), jnp.float32),      # delta
                pltpu.VMEM((L, N), jnp.float32),      # B
                pltpu.VMEM((L, N), jnp.float32),      # C
                pltpu.VMEM((Lc, N, D), jnp.float32),  # dA chunk
                pltpu.VMEM((Lc, N, D), jnp.float32),  # dB*u chunk / h history
                pltpu.VMEM((Lc, D), jnp.float32),     # y chunk
                pltpu.VMEM((L, D), jnp.float32),      # spatial-order accumulator
            ]),
        compiler_params=pltpu.CompilerParams(
            dimension_semantics=("parallel", "arbitrary"),
            vmem_limit_bytes=48 * 1024 * 1024),
    )(perm, xs, wdelta, wb, wc, bias, A_nd, Dsk)


# ---------------- LayerNorm + SiLU gate + out_proj (row-tiled) ----------------

def _norm_gate_proj_kernel(y_ref, z_ref, g_ref, b_ref, w_ref, o_ref):
    y = y_ref[...]
    mu = jnp.mean(y, axis=1, keepdims=True)
    var = jnp.mean(jnp.square(y - mu), axis=1, keepdims=True)
    yn = (y - mu) * lax.rsqrt(var + 1e-5)                   # LayerNorm eps=1e-5
    yn = yn * g_ref[...] + b_ref[...]
    z = z_ref[...]
    gated = yn * (z * jax.nn.sigmoid(z))                    # y * SiLU(z)
    o_ref[...] = jnp.dot(gated, w_ref[...],
                         preferred_element_type=jnp.float32)


def norm_gate_proj(y, z, gamma, beta, w_out_t, block_m=256):
    M, D = y.shape
    Nout = w_out_t.shape[1]
    bm = min(block_m, M)
    return pl.pallas_call(
        _norm_gate_proj_kernel,
        out_shape=jax.ShapeDtypeStruct((M, Nout), jnp.float32),
        grid=(pl.cdiv(M, bm),),
        in_specs=[
            pl.BlockSpec((bm, D), lambda i: (i, 0)),
            pl.BlockSpec((bm, D), lambda i: (i, 0)),
            pl.BlockSpec((1, D), lambda i: (0, 0)),
            pl.BlockSpec((1, D), lambda i: (0, 0)),
            pl.BlockSpec((D, Nout), lambda i: (0, 0)),
        ],
        out_specs=pl.BlockSpec((bm, Nout), lambda i: (i, 0)),
        compiler_params=pltpu.CompilerParams(
            dimension_semantics=("parallel",)),
    )(y.astype(jnp.float32), z.astype(jnp.float32),
      gamma.reshape(1, D).astype(jnp.float32),
      beta.reshape(1, D).astype(jnp.float32),
      w_out_t.astype(jnp.float32))


# ------------------------- SS2D forward (wrapper) -----------------------------

def ss2d_forward(x, p):
    B, H, W, C = x.shape
    D = p['d_inner']
    N = p['d_state']
    K = p['K']
    R = p['dt_rank']
    L = H * W

    # in_proj
    xz = matmul(x.reshape(B * H * W, C), p['w_in'].T)         # (BHW, 2D)
    xz = xz.reshape(B, H, W, 2 * D)
    x1, z = xz[..., :D], xz[..., D:]

    # depthwise conv + SiLU (NHWC, d_inner on the lane axis)
    xc = dwconv_silu(x1, p['conv_w'], p['conv_b'])            # (B, H, W, D)
    xflat = xc.reshape(B, L, D)

    # directional snake-scan sequences: one gather with the fused
    # (scan-order o transpose/rot90 o flip) permutation table.
    perm = p['perm']                                          # (K, L) int32
    xs = jnp.take(xflat, perm.reshape(-1), axis=1)            # (B, K*L, D)
    xs = xs.reshape(B * K, L, D).astype(jnp.float32)

    # per-direction weights, pre-arranged for lane-dense in-kernel matmuls
    xw = p['x_proj_weight']                                   # (K, R+2N, D)
    dtw = p['dt_projs_weight']                                # (K, D, R)
    wdelta = jnp.einsum('krd,ker->kde', xw[:, :R, :], dtw)    # (K, D, D)
    wb = jnp.swapaxes(xw[:, R:R + N, :], 1, 2)                # (K, D, N)
    wc = jnp.swapaxes(xw[:, R + N:, :], 1, 2)                 # (K, D, N)
    bias = p['dt_projs_bias'].reshape(K, 1, D)
    A_nd = -jnp.exp(p['A_logs'].astype(jnp.float32)).reshape(K, D, N)
    A_nd = jnp.swapaxes(A_nd, 1, 2)                           # (K, N, D)
    Dsk = p['Ds'].astype(jnp.float32).reshape(K, 1, D)

    # selective scan with fused x_proj/dt_proj and fused decode+sum
    y = ssm_scan(perm, xs, wdelta, wb, wc, bias, A_nd, Dsk, B=B, K=K)  # (B,L,D)

    # LayerNorm -> gate with SiLU(z) -> out_proj
    out = norm_gate_proj(y.reshape(B * L, D), z.reshape(B * L, D),
                         p['ln_g'], p['ln_b'], p['w_out'].T)
    return out.reshape(B, H, W, C)


# ------------------- deterministic parameter initialization -------------------

def _build_direction_perms(size):
    H = W = size
    L = H * W
    idx = np.arange(L).reshape(H, W)
    # 'scan' (boustrophedon / snake) ordering == SCANS(scan_type='scan')
    snake = idx.copy()
    snake[1::2] = snake[1::2, ::-1]
    locs_flat = snake.reshape(-1)
    views = [idx, idx.T, np.rot90(idx, 1), np.rot90(idx, 1).T]
    enc = [v.reshape(-1)[locs_flat] for v in views]   # encode == gather(locs_flat)
    perm = np.stack(enc + [e[::-1] for e in enc], axis=0)     # (8, L)
    return perm.astype(np.int32)


def init_params(key, d_model=4, d_state=16, d_conv=3, expand=2, size=8,
                num_direction=8, dt_min=0.001, dt_max=0.1, dt_init_floor=1e-4):
    d_inner = int(expand * d_model)
    dt_rank = math.ceil(d_model / 16)
    K = num_direction
    ks = jax.random.split(key, 8)
    p = {'d_inner': d_inner, 'd_state': d_state, 'dt_rank': dt_rank, 'K': K}

    p['w_in'] = jax.random.normal(ks[0], (2 * d_inner, d_model), jnp.float32) * 0.2
    p['conv_w'] = jax.random.normal(ks[1], (d_inner, 1, d_conv, d_conv),
                                    jnp.float32) * 0.2
    p['conv_b'] = jax.random.normal(ks[2], (d_inner,), jnp.float32) * 0.1
    p['x_proj_weight'] = (jax.random.normal(
        ks[3], (K, dt_rank + 2 * d_state, d_inner), jnp.float32)
        * (d_inner ** -0.5))
    std = dt_rank ** -0.5
    p['dt_projs_weight'] = jax.random.uniform(
        ks[4], (K, d_inner, dt_rank), jnp.float32, -std, std)
    dt = jnp.exp(jax.random.uniform(ks[5], (K, d_inner), jnp.float32)
                 * (math.log(dt_max) - math.log(dt_min)) + math.log(dt_min))
    dt = jnp.clip(dt, dt_init_floor)
    p['dt_projs_bias'] = dt + jnp.log(-jnp.expm1(-dt))        # inverse softplus
    A = jnp.tile(jnp.arange(1, d_state + 1, dtype=jnp.float32)[None, :],
                 (K * d_inner, 1))
    p['A_logs'] = jnp.log(A)
    p['Ds'] = jnp.ones((K * d_inner,), jnp.float32)
    p['ln_g'] = jnp.ones((d_inner,), jnp.float32)
    p['ln_b'] = jnp.zeros((d_inner,), jnp.float32)
    p['w_out'] = jax.random.normal(ks[6], (d_model, d_inner), jnp.float32) * 0.2

    # fused per-direction permutation table (encode order == scatter positions)
    p['perm'] = jnp.asarray(_build_direction_perms(size), jnp.int32)
    return p


if __name__ == "__main__":
    key = jax.random.PRNGKey(0)
    pkey, xkey = jax.random.split(key)
    B, H, W, d_model = 2, 8, 8, 4                             # size=8 (default SS2D)
    params = init_params(pkey, d_model=d_model, size=H)
    x = jax.random.normal(xkey, (B, H, W, d_model), jnp.float32)

    out = ss2d_forward(x, params)
    out = jax.block_until_ready(out)
    assert out.shape == (B, H, W, d_model)
    assert bool(jnp.all(jnp.isfinite(out)))
    print("KERNEL_OK")
</pallas_src>

<mosaic_0001>
module attributes {stable_mosaic.version = 11 : i64} {
  func.func @_matmul_kernel(%arg0: i32, %arg1: memref<128x4xf32, #tpu.memory_space<vmem>>, %arg2: memref<4x16xf32, #tpu.memory_space<vmem>>, %arg3: memref<128x16xf32, #tpu.memory_space<vmem>>) attributes {dimension_semantics = [#tpu.dimension_semantics<parallel>], iteration_bounds = array<i64: 1>, scalar_prefetch = 0 : i64, scratch_operands = 0 : i64, tpu.core_type = #tpu.core_type<tc>, window_params = [{transform_indices = @transform_0, window_bounds = array<i64: 128, 4>}, {pipeline_mode = #tpu.pipeline_mode<synchronous>, transform_indices = @transform_1, window_bounds = array<i64: 4, 16>}, {transform_indices = @transform_2, window_bounds = array<i64: 128, 16>}]} {
    %c0 = arith.constant 0 : index
    %c0_0 = arith.constant 0 : index
    %0 = vector.load %arg1[%c0, %c0_0] : memref<128x4xf32, #tpu.memory_space<vmem>>, vector<128x4xf32>
    %c0_1 = arith.constant 0 : index
    %c0_2 = arith.constant 0 : index
    %1 = vector.load %arg2[%c0_1, %c0_2] : memref<4x16xf32, #tpu.memory_space<vmem>>, vector<4x16xf32>
    %cst = arith.constant dense<0.000000e+00> : vector<128x16xf32>
    %2 = tpu.matmul %0, %1, %cst {dimension_numbers = #tpu.dot_dimension_numbers<[1], [0], [0], [1], [0, 0, 1, 1], [], []>} : vector<128x4xf32>, vector<4x16xf32>, vector<128x16xf32> -> vector<128x16xf32>
    %c0_3 = arith.constant 0 : index
    %c0_4 = arith.constant 0 : index
    %3 = vector.load %arg3[%c0_3, %c0_4] : memref<128x16xf32, #tpu.memory_space<vmem>>, vector<128x16xf32>
    tpu.vector_store %arg3[%c0_3, %c0_4], %2 {strides = array<i32>} : memref<128x16xf32, #tpu.memory_space<vmem>>, vector<128x16xf32>,
    return
  }
  func.func @transform_0(%arg0: i32) -> (i32, i32) {
    %c0_i32 = arith.constant 0 : i32
    %c0_i32_0 = arith.constant 0 : i32
    return %arg0, %c0_i32 : i32, i32
  }
  func.func @transform_1(%arg0: i32) -> (i32, i32) {
    %c0_i32 = arith.constant 0 : i32
    %c0_i32_0 = arith.constant 0 : i32
    %c0_i32_1 = arith.constant 0 : i32
    return %c0_i32, %c0_i32_0 : i32, i32
  }
  func.func @transform_2(%arg0: i32) -> (i32, i32) {
    %c0_i32 = arith.constant 0 : i32
    %c0_i32_0 = arith.constant 0 : i32
    return %arg0, %c0_i32 : i32, i32
  }
}

</mosaic_0001>

<llo_original>
// kernel: tpu_custom_call.1
$region0: #{tpu_custom_call.1}
  #allocation0 [shape = 'u32[]', space=smem, size = 0x4, offset = 0x4, fixed_abs, tag = 'smem constant byte address 0x4 - core index']
  #allocation1 [shape = 'u32[144,128]{1,0:T(1,128)}', space=vmem, size = 0x12000, scoped, tag = 'internal scratch']
  %s0 = inlined_call_operand.vmem [shape: f32[128,4], index: 0, kind: input, shape index: {}]
  %s1 = inlined_call_operand.vmem [shape: f32[4,16], index: 1, kind: input, shape index: {}]
  %s2 = inlined_call_operand.vmem [shape: f32[128,16], index: 2, kind: output, shape index: {}]
  %s3 = sld [smem:[#allocation0]]
  $region18: #{tpu_custom_call.1} parent=0
    _
  %s5 = ssub.s32 1, %s3
  %s6 = scalar_select 0, %s5, %s3
  // Predicated region
  $region2: #{tpu_custom_call.1} parent=0 // pred_check
    _
  $region3: #{tpu_custom_call.1} parent=0 // pred_check_branch
    %8 = sbr.rel (0) target = $region5
  $region4: #{tpu_custom_call.1} parent=0 // pred_region
    _
  $region5: #{tpu_custom_call.1} parent=0 // pred_fallthru
    _
  // Predicated region
  $region6: #{tpu_custom_call.1} parent=0 // pred_check
    _
  $region7: #{tpu_custom_call.1} parent=0 // pred_check_branch
    %10 = sbr.rel (0) target = $region9
  $region8: #{tpu_custom_call.1} parent=0 // pred_region
    _
  $region9: #{tpu_custom_call.1} parent=0 // pred_fallthru
    _
  %v11 = vld [vmem:[%s0] sm:$0xff]
  %v12 = vld [vmem:[%s0 + $0x8] sm:$0xff]
  %v13 = vld [vmem:[%s0 + $0x10] sm:$0xff]
  %v14 = vld [vmem:[%s0 + $0x18] sm:$0xff]
  %v15 = vld [vmem:[%s0 + $0x20] sm:$0xff]
  %v16 = vld [vmem:[%s0 + $0x28] sm:$0xff]
  %v17 = vld [vmem:[%s0 + $0x30] sm:$0xff]
  %v18 = vld [vmem:[%s0 + $0x38] sm:$0xff]
  %v19 = vld [vmem:[%s0 + $0x40] sm:$0xff]
  %v20 = vld [vmem:[%s0 + $0x48] sm:$0xff]
  %v21 = vld [vmem:[%s0 + $0x50] sm:$0xff]
  %v22 = vld [vmem:[%s0 + $0x58] sm:$0xff]
  %v23 = vld [vmem:[%s0 + $0x60] sm:$0xff]
  %v24 = vld [vmem:[%s0 + $0x68] sm:$0xff]
  %v25 = vld [vmem:[%s0 + $0x70] sm:$0xff]
  %v26 = vld [vmem:[%s0 + $0x78] sm:$0xff]
  %v27 = vld [vmem:[%s1] sm:$0xf]
  %vm28 = vcmask 31744
  %v30 = vsel %vm28, %v11, 0
  %v33 = vsel %vm28, %v12, 0
  %v36 = vsel %vm28, %v13, 0
  %v39 = vsel %vm28, %v14, 0
  %v42 = vsel %vm28, %v15, 0
  %v45 = vsel %vm28, %v16, 0
  %v48 = vsel %vm28, %v17, 0
  %v51 = vsel %vm28, %v18, 0
  %v54 = vsel %vm28, %v19, 0
  %v57 = vsel %vm28, %v20, 0
  %v60 = vsel %vm28, %v21, 0
  %v63 = vsel %vm28, %v22, 0
  %v66 = vsel %vm28, %v23, 0
  %v69 = vsel %vm28, %v24, 0
  %v72 = vsel %vm28, %v25, 0
  %v75 = vsel %vm28, %v26, 0
  %vm77 = vcmask 1043456
  %v79 = vsel %vm77, %v27, 0
  %81 = vmatprep.subr.mxu0 0.0
  %82 = vmatpush1.msra.mxu0 0.0
  %83 = vmatprep.subr.mxu0 0.0
  %84 = vmatpush1.msra.mxu0 0.0
  %85 = vmatprep.subr.mxu0 0.0
  %86 = vmatpush1.msra.mxu0 0.0
  %87 = vmatprep.subr.mxu0 0.0
  %88 = vmatpush1.msra.mxu0 0.0
  %89 = vmatprep.subr.mxu0 0.0
  %90 = vmatpush1.msra.mxu0 0.0
  %91 = vmatprep.subr.mxu0 0.0
  %92 = vmatpush1.msra.mxu0 0.0
  %93 = vmatprep.subr.mxu0 0.0
  %94 = vmatpush1.msra.mxu0 0.0
  %95 = vmatprep.subr.mxu0 0.0
  %96 = vmatpush1.msra.mxu0 0.0
  %97 = vmatprep.subr.mxu0 0.0
  %98 = vmatpush1.msra.mxu0 0.0
  %99 = vmatprep.subr.mxu0 0.0
  %100 = vmatpush1.msra.mxu0 0.0
  %101 = vmatprep.subr.mxu0 0.0
  %102 = vmatpush1.msra.mxu0 0.0
  %103 = vmatprep.subr.mxu0 0.0
  %104 = vmatpush1.msra.mxu0 0.0
  %105 = vmatprep.subr.mxu0 0.0
  %106 = vmatpush1.msra.mxu0 0.0
  %107 = vmatprep.subr.mxu0 0.0
  %108 = vmatpush1.msra.mxu0 0.0
  %109 = vmatprep.subr.mxu0 0.0
  %110 = vmatpush1.msra.mxu0 0.0
  %111 = vmatprep.subr.mxu0 0.0
  %112 = vmatpush1.msra.mxu0 %v79
  %113 = vmatprep.subr.mxu0 0.0
  %114 = vmatpush2.msra.mxu0 0.0
  %115 = vmatprep.subr.mxu0 0.0
  %116 = vmatpush2.msra.mxu0 0.0
  %117 = vmatprep.subr.mxu0 0.0
  %118 = vmatpush2.msra.mxu0 0.0
  %119 = vmatprep.subr.mxu0 0.0
  %120 = vmatpush2.msra.mxu0 0.0
  %121 = vmatprep.subr.mxu0 0.0
  %122 = vmatpush2.msra.mxu0 0.0
  %123 = vmatprep.subr.mxu0 0.0
  %124 = vmatpush2.msra.mxu0 0.0
  %125 = vmatprep.subr.mxu0 0.0
  %126 = vmatpush2.msra.mxu0 0.0
  %127 = vmatprep.subr.mxu0 0.0
  %128 = vmatpush2.msra.mxu0 0.0
  %129 = vmatprep.subr.mxu0 0.0
  %130 = vmatpush2.msra.mxu0 0.0
  %131 = vmatprep.subr.mxu0 0.0
  %132 = vmatpush2.msra.mxu0 0.0
  %133 = vmatprep.subr.mxu0 0.0
  %134 = vmatpush2.msra.mxu0 0.0
  %135 = vmatprep.subr.mxu0 0.0
  %136 = vmatpush2.msra.mxu0 0.0
  %137 = vmatprep.subr.mxu0 0.0
  %138 = vmatpush2.msra.mxu0 0.0
  %139 = vmatprep.subr.mxu0 0.0
  %140 = vmatpush2.msra.mxu0 0.0
  %141 = vmatprep.subr.mxu0 0.0
  %142 = vmatpush2.msra.mxu0 0.0
  %143 = vmatprep.subr.mxu0 0.0
  %144 = vmatpush2.msra.mxu0 0.0
  %145 = vmatprep.mubr.f32.mxu0 0.0
  %146 = vmatmul.mubr.f32.gmra.mxu0 %v30
  %v147 = vpop.f32.mrf.mxu0
  %v148 = vadd.f32 0.0, %v147
  %v149 = vpop.f32.mrf.mxu0
  %150 = vmatprep.mubr.f32.mxu0 0.0
  %151 = vmatmul.mubr.f32.gmra.mxu0 %v33
  %v152 = vpop.f32.mrf.mxu0
  %v153 = vadd.f32 0.0, %v152
  %v154 = vpop.f32.mrf.mxu0
  %155 = vmatprep.mubr.f32.mxu0 0.0
  %156 = vmatmul.mubr.f32.gmra.mxu0 %v36
  %v157 = vpop.f32.mrf.mxu0
  %v158 = vadd.f32 0.0, %v157
  %v159 = vpop.f32.mrf.mxu0
  %160 = vmatprep.mubr.f32.mxu0 0.0
  %161 = vmatmul.mubr.f32.gmra.mxu0 %v39
  %v162 = vpop.f32.mrf.mxu0
  %v163 = vadd.f32 0.0, %v162
  %v164 = vpop.f32.mrf.mxu0
  %165 = vmatprep.mubr.f32.mxu0 0.0
  %166 = vmatmul.mubr.f32.gmra.mxu0 %v42
  %v167 = vpop.f32.mrf.mxu0
  %v168 = vadd.f32 0.0, %v167
  %v169 = vpop.f32.mrf.mxu0
  %170 = vmatprep.mubr.f32.mxu0 0.0
  %171 = vmatmul.mubr.f32.gmra.mxu0 %v45
  %v172 = vpop.f32.mrf.mxu0
  %v173 = vadd.f32 0.0, %v172
  %v174 = vpop.f32.mrf.mxu0
  %175 = vmatprep.mubr.f32.mxu0 0.0
  %176 = vmatmul.mubr.f32.gmra.mxu0 %v48
  %v177 = vpop.f32.mrf.mxu0
  %v178 = vadd.f32 0.0, %v177
  %v179 = vpop.f32.mrf.mxu0
  %180 = vmatprep.mubr.f32.mxu0 0.0
  %181 = vmatmul.mubr.f32.gmra.mxu0 %v51
  %v182 = vpop.f32.mrf.mxu0
  %v183 = vadd.f32 0.0, %v182
  %v184 = vpop.f32.mrf.mxu0
  %185 = vmatprep.mubr.f32.mxu0 0.0
  %186 = vmatmul.mubr.f32.gmra.mxu0 %v54
  %v187 = vpop.f32.mrf.mxu0
  %v188 = vadd.f32 0.0, %v187
  %v189 = vpop.f32.mrf.mxu0
  %190 = vmatprep.mubr.f32.mxu0 0.0
  %191 = vmatmul.mubr.f32.gmra.mxu0 %v57
  %v192 = vpop.f32.mrf.mxu0
  %v193 = vadd.f32 0.0, %v192
  %v194 = vpop.f32.mrf.mxu0
  %195 = vmatprep.mubr.f32.mxu0 0.0
  %196 = vmatmul.mubr.f32.gmra.mxu0 %v60
  %v197 = vpop.f32.mrf.mxu0
  %v198 = vadd.f32 0.0, %v197
  %v199 = vpop.f32.mrf.mxu0
  %200 = vmatprep.mubr.f32.mxu0 0.0
  %201 = vmatmul.mubr.f32.gmra.mxu0 %v63
  %v202 = vpop.f32.mrf.mxu0
  %v203 = vadd.f32 0.0, %v202
  %v204 = vpop.f32.mrf.mxu0
  %205 = vmatprep.mubr.f32.mxu0 0.0
  %206 = vmatmul.mubr.f32.gmra.mxu0 %v66
  %v207 = vpop.f32.mrf.mxu0
  %v208 = vadd.f32 0.0, %v207
  %v209 = vpop.f32.mrf.mxu0
  %210 = vmatprep.mubr.f32.mxu0 0.0
  %211 = vmatmul.mubr.f32.gmra.mxu0 %v69
  %v212 = vpop.f32.mrf.mxu0
  %v213 = vadd.f32 0.0, %v212
  %v214 = vpop.f32.mrf.mxu0
  %215 = vmatprep.mubr.f32.mxu0 0.0
  %216 = vmatmul.mubr.f32.gmra.mxu0 %v72
  %v217 = vpop.f32.mrf.mxu0
  %v218 = vadd.f32 0.0, %v217
  %v219 = vpop.f32.mrf.mxu0
  %220 = vmatprep.mubr.f32.mxu0 0.0
  %221 = vmatmul.mubr.f32.gmra.mxu0 %v75
  %v222 = vpop.f32.mrf.mxu0
  %v223 = vadd.f32 0.0, %v222
  %v224 = vpop.f32.mrf.mxu0
  %225 = vdwg.mxu0
  %vm226 = vcmask 130048
  %227 = vst.msk [vmem:[%s2] sm:$0xff] %vm226, %v148
  %228 = vst.msk [vmem:[%s2 + $0x8] sm:$0xff] %vm226, %v153
  %229 = vst.msk [vmem:[%s2 + $0x10] sm:$0xff] %vm226, %v158
  %230 = vst.msk [vmem:[%s2 + $0x18] sm:$0xff] %vm226, %v163
  %231 = vst.msk [vmem:[%s2 + $0x20] sm:$0xff] %vm226, %v168
  %232 = vst.msk [vmem:[%s2 + $0x28] sm:$0xff] %vm226, %v173
  %233 = vst.msk [vmem:[%s2 + $0x30] sm:$0xff] %vm226, %v178
  %234 = vst.msk [vmem:[%s2 + $0x38] sm:$0xff] %vm226, %v183
  %235 = vst.msk [vmem:[%s2 + $0x40] sm:$0xff] %vm226, %v188
  %236 = vst.msk [vmem:[%s2 + $0x48] sm:$0xff] %vm226, %v193
  %237 = vst.msk [vmem:[%s2 + $0x50] sm:$0xff] %vm226, %v198
  %238 = vst.msk [vmem:[%s2 + $0x58] sm:$0xff] %vm226, %v203
  %239 = vst.msk [vmem:[%s2 + $0x60] sm:$0xff] %vm226, %v208
  %240 = vst.msk [vmem:[%s2 + $0x68] sm:$0xff] %vm226, %v213
  %241 = vst.msk [vmem:[%s2 + $0x70] sm:$0xff] %vm226, %v218
  %242 = vst.msk [vmem:[%s2 + $0x78] sm:$0xff] %vm226, %v223
  // Predicated region
  $region10: #{tpu_custom_call.1} parent=0 // pred_check
    _
  $region11: #{tpu_custom_call.1} parent=0 // pred_check_branch
    %244 = sbr.rel (0) target = $region13
  $region12: #{tpu_custom_call.1} parent=0 // pred_region
    _
  $region13: #{tpu_custom_call.1} parent=0 // pred_fallthru
    _
  // Predicated region
  $region14: #{tpu_custom_call.1} parent=0 // pred_check
    _
  $region15: #{tpu_custom_call.1} parent=0 // pred_check_branch
    %246 = sbr.rel (0) target = $region17
  $region16: #{tpu_custom_call.1} parent=0 // pred_region
    _
  $region17: #{tpu_custom_call.1} parent=0 // pred_fallthru
    _

</llo_original>
